<compile_context>
chip_gen: v7x
topology: tpu7x:2x2x1
jax: 0.10.0
libtpu: 0.0.40
codegen_flags: <defaults>
</compile_context>

<pallas_src>
import jax
import jax.numpy as jnp
from jax import lax
from jax.experimental import pallas as pl
from jax.experimental.pallas import tpu as pltpu

LANE = 128
SUBLANE = 8
TARGET_BLOCK_BYTES = 2 * 1024 * 1024   # per input per pipeline buffer (f32-equivalent)
TARGET_CHUNK_ELEMS = 64 * LANE         # ~8 f32 vregs per input per reduction chunk
MAX_DIRECT_COLS = 4096                 # widest trailing dim we tile directly
MIN_KERNEL_NUMEL = 1 << 20             # below this, plain jnp beats pallas_call overhead


def _choose_tiling(rows, cols):
    """Pick (block_rows, chunk_rows).

    chunk_rows: multiple of 8, chunk covers <= ~TARGET_CHUNK_ELEMS elements.
    block_rows: multiple of chunk_rows, <= rows, ~TARGET_BLOCK_BYTES per buffer.
    """
    chunk_rows = max(
        SUBLANE, (min(TARGET_CHUNK_ELEMS // cols, rows) // SUBLANE) * SUBLANE
    )
    block_rows = max(
        chunk_rows, (TARGET_BLOCK_BYTES // (cols * 4) // chunk_rows) * chunk_rows
    )
    block_rows = min(block_rows, (rows // chunk_rows) * chunk_rows)
    return block_rows, chunk_rows


def _make_sse_kernel(block_rows, chunk_rows, cols, tail_rows):
    """Kernel producing one (8, cols) f32 partial sum of squared diffs per grid step.

    tail_rows: number of valid rows in the (partial) last grid block; 0 => all full.
    """
    n_chunks = block_rows // chunk_rows
    unroll = 2 if chunk_rows * cols <= TARGET_CHUNK_ELEMS else 1

    def chunk_sq_sum(pred_ref, targ_ref, start, valid_rows):
        # Cast to f32 before any arithmetic (v5e VPU has no bf16 ALU).
        x = pred_ref[pl.ds(start, chunk_rows), :].astype(jnp.float32)
        y = targ_ref[pl.ds(start, chunk_rows), :].astype(jnp.float32)
        d = x - y
        sq = d * d
        if valid_rows is not None and valid_rows < chunk_rows:
            rid = lax.broadcasted_iota(jnp.int32, sq.shape, 0)
            # NOTE: must stay a select (jnp.where), NOT a multiply-by-mask: rows
            # past `valid_rows` were never DMA'd and may hold NaN/Inf garbage
            # which a multiply would propagate.
            sq = jnp.where(rid < valid_rows, sq, 0.0)
        # (chunk_rows, cols) -> (chunk_rows//8, 8, cols) regroups whole (8,128)
        # tiles; the axis-0 sum is pure cross-vreg VPU adds (no XLU reduction).
        return sq.reshape(chunk_rows // SUBLANE, SUBLANE, cols).sum(axis=0)

    def full_block_sum(pred_ref, targ_ref):
        if n_chunks == 1:
            return chunk_sq_sum(pred_ref, targ_ref, 0, None)

        def body(c, acc):
            start = pl.multiple_of(c * chunk_rows, chunk_rows)
            return acc + chunk_sq_sum(pred_ref, targ_ref, start, None)

        return lax.fori_loop(
            0, n_chunks, body, jnp.zeros((SUBLANE, cols), jnp.float32), unroll=unroll
        )

    def tail_block_sum(pred_ref, targ_ref):
        # Cold path: runs exactly once (last grid step). `tail_rows` is static,
        # so chunks beyond the valid rows are skipped at trace time.
        acc = jnp.zeros((SUBLANE, cols), jnp.float32)
        full = tail_rows // chunk_rows
        for c in range(full):
            acc = acc + chunk_sq_sum(pred_ref, targ_ref, c * chunk_rows, None)
        rem = tail_rows - full * chunk_rows
        if rem:
            acc = acc + chunk_sq_sum(pred_ref, targ_ref, full * chunk_rows, rem)
        return acc

    def kernel(pred_ref, targ_ref, out_ref):
        if tail_rows == 0:
            out_ref[...] = full_block_sum(pred_ref, targ_ref).reshape(1, SUBLANE, cols)
        else:
            i = pl.program_id(0)
            last = pl.num_programs(0) - 1

            @pl.when(i != last)          # hot path: completely mask-free
            def _():
                out_ref[...] = full_block_sum(pred_ref, targ_ref).reshape(
                    1, SUBLANE, cols
                )

            @pl.when(i == last)          # ragged last block only
            def _():
                out_ref[...] = tail_block_sum(pred_ref, targ_ref).reshape(
                    1, SUBLANE, cols
                )

    return kernel


def _sse_partials(p2, t2, rows, cols):
    """Pallas call: (rows, cols) pred/target -> (num_blocks, 8, cols) f32 partials."""
    block_rows, chunk_rows = _choose_tiling(rows, cols)
    num_blocks = -(-rows // block_rows)
    tail_rows = rows % block_rows

    in_bytes = p2.size * p2.dtype.itemsize + t2.size * t2.dtype.itemsize
    out_bytes = num_blocks * SUBLANE * cols * 4
    cost = pl.CostEstimate(
        flops=3 * rows * cols, transcendentals=0, bytes_accessed=in_bytes + out_bytes
    )

    return pl.pallas_call(
        _make_sse_kernel(block_rows, chunk_rows, cols, tail_rows),
        out_shape=jax.ShapeDtypeStruct((num_blocks, SUBLANE, cols), jnp.float32),
        grid_spec=pltpu.PrefetchScalarGridSpec(
            num_scalar_prefetch=0,
            grid=(num_blocks,),
            in_specs=[
                pl.BlockSpec((block_rows, cols), lambda i: (i, 0)),
                pl.BlockSpec((block_rows, cols), lambda i: (i, 0)),
            ],
            out_specs=pl.BlockSpec((1, SUBLANE, cols), lambda i: (i, 0, 0)),
        ),
        compiler_params=pltpu.CompilerParams(
            # Every grid step writes its own partial -> fully parallel grid.
            # TODO(synk): on v7x use CORE_PARALLEL / pl.core_map to split the
            # stream across both TensorCores explicitly.
            dimension_semantics=("parallel",),
        ),
        cost_estimate=cost,
    )(p2, t2)


def mse_loss(pred, target, *, min_kernel_numel=MIN_KERNEL_NUMEL):
    """sum((pred - target)**2) / N  — matches the PyTorch MSELoss module (forward)."""
    assert pred.size == target.size, "pred/target must have the same element count"
    n = pred.size
    if n == 0:
        return jnp.float32(jnp.nan)  # 0/0, matches PyTorch behavior on empty input

    def _jnp_sse(p, t):
        d = p.astype(jnp.float32) - t.astype(jnp.float32)
        return jnp.sum(d * d)

    # Small inputs: fixed pallas_call overhead dominates -> plain jnp is faster.
    if n < max(min_kernel_numel, SUBLANE * LANE):
        return _jnp_sse(pred, target) / jnp.float32(n)

    if (
        pred.shape == target.shape
        and pred.ndim >= 2
        and pred.shape[-1] % LANE == 0
        and pred.shape[-1] <= MAX_DIRECT_COLS
    ):
        # Layout-friendly path: collapse leading dims only (trailing lane dim
        # untouched) -> typically a view, not an HBM relayout copy.
        cols = pred.shape[-1]
        rows = n // cols
        p2 = pred.reshape(rows, cols)
        t2 = target.reshape(rows, cols)
        tail_sum = None
    else:
        # Generic shapes: flatten to lane-dense (rows, 128).  This may force a
        # relayout copy (unavoidable for arbitrary trailing dims); the sub-lane
        # tail (<128 elements) is summed in plain jnp so no padded full-array
        # copy ever materializes.
        cols = LANE
        rows = n // LANE
        n_main = rows * LANE
        pf = pred.reshape(-1)
        tf = target.reshape(-1)
        if n_main == n:
            tail_sum = None
            p2 = pf.reshape(rows, cols)
            t2 = tf.reshape(rows, cols)
        else:
            tail_sum = _jnp_sse(pf[n_main:], tf[n_main:])
            p2 = pf[:n_main].reshape(rows, cols)
            t2 = tf[:n_main].reshape(rows, cols)

    if rows < SUBLANE:
        # Not even one (8, lane) tile of rows -> pure jnp.
        return _jnp_sse(pred, target) / jnp.float32(n)

    partials = _sse_partials(p2, t2, rows, cols)
    total = jnp.sum(partials)
    if tail_sum is not None:
        total = total + tail_sum
    return total / jnp.float32(n)


if __name__ == "__main__":
    key = jax.random.PRNGKey(0)
    k1, k2, k3, k4, k5, k6, k7, k8 = jax.random.split(key, 8)

    def ref_loss(p, t):
        d = p.astype(jnp.float32) - t.astype(jnp.float32)
        return jnp.sum(d * d) / p.size

    def check(out, ref):
        assert jnp.allclose(out, ref, rtol=1e-4, atol=1e-6), (out, ref)

    # 1) Small shape consistent with the module's use; forced through the kernel
    #    (generic-trailing-dim path, single block).
    pred = jax.random.normal(k1, (2, 4, 16, 16), dtype=jnp.float32)
    target = jax.random.normal(k2, (2, 4, 16, 16), dtype=jnp.float32)
    out = mse_loss(pred, target, min_kernel_numel=0)
    jax.block_until_ready(out)
    check(out, ref_loss(pred, target))

    # 1b) Same inputs through the default small-N jnp fallback path.
    out_fb = mse_loss(pred, target)
    jax.block_until_ready(out_fb)
    check(out_fb, ref_loss(pred, target))

    # 2) Layout-friendly path (trailing dim multiple of 128, no relayout).
    p2 = jax.random.normal(k3, (2, 4, 8, 128), dtype=jnp.float32)
    t2 = jax.random.normal(k4, (2, 4, 8, 128), dtype=jnp.float32)
    out2 = mse_loss(p2, t2, min_kernel_numel=0)
    jax.block_until_ready(out2)
    check(out2, ref_loss(p2, t2))

    # 3) Ragged shape: exercises masked last block + sub-lane jnp tail.
    p3 = jax.random.normal(k5, (3, 5, 7, 11), dtype=jnp.float32)
    t3 = jax.random.normal(k6, (3, 5, 7, 11), dtype=jnp.float32)
    out3 = mse_loss(p3, t3, min_kernel_numel=0)
    jax.block_until_ready(out3)
    check(out3, ref_loss(p3, t3))

    # 4) Multi-block, multi-chunk case (fori_loop reduction + masked last block).
    p4 = jax.random.normal(k7, (6, 55, 4, 256), dtype=jnp.float32)
    t4 = jax.random.normal(k8, (6, 55, 4, 256), dtype=jnp.float32)
    out4 = mse_loss(p4, t4, min_kernel_numel=0)
    jax.block_until_ready(out4)
    check(out4, ref_loss(p4, t4))

    print("KERNEL_OK")
</pallas_src>

<mosaic_0001>
module attributes {stable_mosaic.version = 11 : i64} {
  func.func @kernel(%arg0: i32, %arg1: memref<16x128xf32, #tpu.memory_space<vmem>>, %arg2: memref<16x128xf32, #tpu.memory_space<vmem>>, %arg3: memref<1x8x128xf32, #tpu.memory_space<vmem>>) attributes {dimension_semantics = [#tpu.dimension_semantics<parallel>], iteration_bounds = array<i64: 1>, scalar_prefetch = 0 : i64, scratch_operands = 0 : i64, tpu.core_type = #tpu.core_type<tc>, window_params = [{transform_indices = @transform_0, window_bounds = array<i64: 16, 128>}, {transform_indices = @transform_1, window_bounds = array<i64: 16, 128>}, {transform_indices = @transform_2, window_bounds = array<i64: 1, 8, 128>}]} {
    %c0 = arith.constant 0 : index
    %c0_0 = arith.constant 0 : index
    %0 = vector.load %arg1[%c0, %c0_0] : memref<16x128xf32, #tpu.memory_space<vmem>>, vector<16x128xf32>
    %c0_1 = arith.constant 0 : index
    %c0_2 = arith.constant 0 : index
    %1 = vector.load %arg2[%c0_1, %c0_2] : memref<16x128xf32, #tpu.memory_space<vmem>>, vector<16x128xf32>
    %2 = arith.subf %0, %1 : vector<16x128xf32>
    %3 = arith.mulf %2, %2 : vector<16x128xf32>
    %4 = vector.shape_cast %3 : vector<16x128xf32> to vector<2x8x128xf32>
    %cst = arith.constant dense<0.000000e+00> : vector<8x128xf32>
    %5 = vector.multi_reduction <add>, %4, %cst [0] : vector<2x8x128xf32> to vector<8x128xf32>
    %6 = vector.shape_cast %5 : vector<8x128xf32> to vector<1x8x128xf32>
    %c0_3 = arith.constant 0 : index
    %c0_4 = arith.constant 0 : index
    %c0_5 = arith.constant 0 : index
    %7 = vector.load %arg3[%c0_3, %c0_4, %c0_5] : memref<1x8x128xf32, #tpu.memory_space<vmem>>, vector<1x8x128xf32>
    tpu.vector_store %arg3[%c0_3, %c0_4, %c0_5], %6 {strides = array<i32>} : memref<1x8x128xf32, #tpu.memory_space<vmem>>, vector<1x8x128xf32>,
    return
  }
  func.func @transform_0(%arg0: i32) -> (i32, i32) {
    %c0_i32 = arith.constant 0 : i32
    %c0_i32_0 = arith.constant 0 : i32
    return %arg0, %c0_i32 : i32, i32
  }
  func.func @transform_1(%arg0: i32) -> (i32, i32) {
    %c0_i32 = arith.constant 0 : i32
    %c0_i32_0 = arith.constant 0 : i32
    return %arg0, %c0_i32 : i32, i32
  }
  func.func @transform_2(%arg0: i32) -> (i32, i32, i32) {
    %c0_i32 = arith.constant 0 : i32
    %c0_i32_0 = arith.constant 0 : i32
    %c0_i32_1 = arith.constant 0 : i32
    return %arg0, %c0_i32, %c0_i32_0 : i32, i32, i32
  }
}

</mosaic_0001>

<llo_original>
// kernel: tpu_custom_call.1
$region0: #{tpu_custom_call.1}
  #allocation0 [shape = 'u32[]', space=smem, size = 0x4, offset = 0x4, fixed_abs, tag = 'smem constant byte address 0x4 - core index']
  #allocation1 [shape = 'u32[144,128]{1,0:T(1,128)}', space=vmem, size = 0x12000, scoped, tag = 'internal scratch']
  %s0 = inlined_call_operand.hbm [shape: f32[16,128], index: 0, kind: input, shape index: {}]
  %s1 = inlined_call_operand.hbm [shape: f32[16,128], index: 1, kind: input, shape index: {}]
  %s2 = inlined_call_operand.hbm [shape: f32[1,8,128], index: 2, kind: output, shape index: {}]
  %s3 = sld [smem:[#allocation0]]
  $region26: #{tpu_custom_call.1} parent=0
    _
  %s5 = ssub.s32 1, %s3
  %s6 = scalar_select 0, %s5, %s3
  $region1: #{tpu_custom_call.1} parent=0
    #allocation2 [shape = 'u8[8192]{0}', space=vmem, size = 0x2000, scoped, tag = 'input window, operand 0, single buffered']
    #allocation3 [shape = 's32[1]{0}', space=sflag, size = 0x4, scoped, tag = 'scoped memory for tpu_custom_call.1']
    #allocation4 [shape = 's32[1]{0}', space=sflag, size = 0x4, scoped, tag = 'scoped memory for tpu_custom_call.1']
    #allocation5 [shape = 'u8[8192]{0}', space=vmem, size = 0x2000, scoped, tag = 'input window, operand 1, single buffered']
    #allocation6 [shape = 's32[1]{0}', space=sflag, size = 0x4, scoped, tag = 'scoped memory for tpu_custom_call.1']
    #allocation7 [shape = 'u8[4096]{0}', space=vmem, size = 0x1000, scoped, tag = 'output window, operand 0, single buffered']
    %7 = vsyncpa [#allocation3], 0
    %8 = vsyncpa [#allocation6], 0
    %9 = vsyncpa [#allocation4], 0
    // Predicated region
    $region2: #{tpu_custom_call.1} parent=1 // pred_check
      _
    $region3: #{tpu_custom_call.1} parent=1 // pred_check_branch
      %11 = sbr.rel (0) target = $region5
    $region4: #{tpu_custom_call.1} parent=1 // pred_region
      %s13 = ssub.s32 256, 256
      %14 = vsyncadd [#allocation3], %s13
      %s15 = sshll.u32 [#allocation2], 4
      %s16 = int_to_ptr.vmem [resolvable:$true] %s15
      %21 = dma.hbm_to_vmem [thread:$0]  %s0, 256, %s16, [#allocation3], 128, 128, 8
    $region5: #{tpu_custom_call.1} parent=1 // pred_fallthru
      _
    // Predicated region
    $region6: #{tpu_custom_call.1} parent=1 // pred_check
      _
    $region7: #{tpu_custom_call.1} parent=1 // pred_check_branch
      %23 = sbr.rel (0) target = $region9
    $region8: #{tpu_custom_call.1} parent=1 // pred_region
      %s25 = ssub.s32 256, 256
      %26 = vsyncadd [#allocation6], %s25
      %s27 = sshll.u32 [#allocation5], 4
      %s28 = int_to_ptr.vmem [resolvable:$true] %s27
      %33 = dma.hbm_to_vmem [thread:$0]  %s1, 256, %s28, [#allocation6], 128, 128, 8
    $region9: #{tpu_custom_call.1} parent=1 // pred_fallthru
      _
    // Predicated region
    $region10: #{tpu_custom_call.1} parent=1 // pred_check
      _
    $region11: #{tpu_custom_call.1} parent=1 // pred_check_branch
      %35 = sbr.rel (0) target = $region13
    $region12: #{tpu_custom_call.1} parent=1 // pred_region
      %36 = dma.done [#allocation3], 256
    $region13: #{tpu_custom_call.1} parent=1 // pred_fallthru
      _
    // Predicated region
    $region14: #{tpu_custom_call.1} parent=1 // pred_check
      _
    $region15: #{tpu_custom_call.1} parent=1 // pred_check_branch
      %38 = sbr.rel (0) target = $region17
    $region16: #{tpu_custom_call.1} parent=1 // pred_region
      %39 = dma.done [#allocation6], 256
    $region17: #{tpu_custom_call.1} parent=1 // pred_fallthru
      _
    %v40 = vld [vmem:[#allocation2] sm:$0xff]
    %v41 = vld [vmem:[#allocation2 + $0x8] sm:$0xff]
    %v42 = vld [vmem:[#allocation5] sm:$0xff]
    %v43 = vld [vmem:[#allocation5 + $0x8] sm:$0xff]
    %v44 = vsub.f32 %v40, %v42
    %v45 = vsub.f32 %v41, %v43
    %v46 = vmul.f32 %v44, %v44
    %v47 = vmul.f32 %v45, %v45
    %v48 = vadd.f32 %v46, %v47
    %49 = vst [vmem:[#allocation7] sm:$0xff] %v48
    // Predicated region
    $region18: #{tpu_custom_call.1} parent=1 // pred_check
      _
    $region19: #{tpu_custom_call.1} parent=1 // pred_check_branch
      %51 = sbr.rel (0) target = $region21
    $region20: #{tpu_custom_call.1} parent=1 // pred_region
      %s53 = ssub.s32 128, 128
      %54 = vsyncadd [#allocation4], %s53
      %s56 = sshll.u32 [#allocation7], 4
      %s57 = int_to_ptr.vmem [resolvable:$true] %s56
      %59 = dma.vmem_to_hbm [thread:$0]  %s57, 128, %s2, [#allocation4]
    $region21: #{tpu_custom_call.1} parent=1 // pred_fallthru
      _
    // Predicated region
    $region22: #{tpu_custom_call.1} parent=1 // pred_check
      _
    $region23: #{tpu_custom_call.1} parent=1 // pred_check_branch
      %61 = sbr.rel (0) target = $region25
    $region24: #{tpu_custom_call.1} parent=1 // pred_region
      %62 = dma.done [#allocation4], 128
    $region25: #{tpu_custom_call.1} parent=1 // pred_fallthru
      _
    %63 = vsyncpa [#allocation3], 1
    %64 = vsyncpa [#allocation6], 1
    %65 = vsyncpa [#allocation4], 1

</llo_original>
